<compile_context>
chip_gen: v7x
topology: tpu7x:2x2x1
jax: 0.10.0
libtpu: 0.0.40
codegen_flags: <defaults>
</compile_context>

<pallas_src>
import jax
import jax.numpy as jnp
from jax.experimental import pallas as pl
from jax.experimental.pallas import tpu as pltpu


def perceptron_kernel(w_ref, x_ref, b_ref, o_ref):
    # w_ref, x_ref: (1, 2) f32 in SMEM; b_ref: (1,) f32 in SMEM; o_ref: (1, 1) f32 in SMEM
    # ~4 scalar ops on the 2-wide scalar slot; no vector units touched.
    o_ref[0, 0] = (
        w_ref[0, 0] * x_ref[0, 0]
        + w_ref[0, 1] * x_ref[0, 1]
        + b_ref[0]
    )


def perceptron_forward(x, w, b):
    """x: (1, 2) f32, w: (1, 2) f32, b: (1,) f32 -> (1, 1) f32 with sum(w*x)+b."""
    return pl.pallas_call(
        perceptron_kernel,
        out_shape=jax.ShapeDtypeStruct((1, 1), jnp.float32),
        in_specs=[
            pl.BlockSpec(memory_space=pltpu.MemorySpace.SMEM),  # w (scalar path)
            pl.BlockSpec(memory_space=pltpu.MemorySpace.SMEM),  # x (scalar path)
            pl.BlockSpec(memory_space=pltpu.MemorySpace.SMEM),  # b (scalar path)
        ],
        out_specs=pl.BlockSpec(memory_space=pltpu.MemorySpace.SMEM),
    )(w, x, b)


if __name__ == "__main__":
    key = jax.random.PRNGKey(0)

    # Parameters matching the module's __init__ shapes (nonzero values so the
    # kernel math is actually exercised). Already f32 / correct shapes so the
    # wrapper does no conversion work.
    w = jnp.array([[0.5, -1.25]], dtype=jnp.float32)  # shape (1, 2)
    b = jnp.array([0.75], dtype=jnp.float32)          # shape (1,)

    # Example input consistent with the forward (broadcasts against w: (1, 2)).
    x = jax.random.normal(key, (1, 2), dtype=jnp.float32)

    out = perceptron_forward(x, w, b)
    jax.block_until_ready(out)

    # Reference check in plain JAX (module returns a scalar: out[0, 0]).
    pred = out[0, 0]
    ref = jnp.sum(w * x) + b[0]
    assert jnp.allclose(pred, ref, atol=1e-6), (pred, ref)

    print("KERNEL_OK")
</pallas_src>

<mosaic_0001>
module attributes {stable_mosaic.version = 11 : i64} {
  func.func @perceptron_kernel(%arg0: memref<1x2xf32, #tpu.memory_space<smem>>, %arg1: memref<1x2xf32, #tpu.memory_space<smem>>, %arg2: memref<1xf32, #tpu.memory_space<smem>>, %arg3: memref<1x1xf32, #tpu.memory_space<smem>>) attributes {dimension_semantics = [], scalar_prefetch = 0 : i64, scratch_operands = 0 : i64, tpu.core_type = #tpu.core_type<tc>} {
    %c0 = arith.constant 0 : index
    %c0_0 = arith.constant 0 : index
    %0 = memref.load %arg0[%c0, %c0_0] : memref<1x2xf32, #tpu.memory_space<smem>>
    %c0_1 = arith.constant 0 : index
    %c0_2 = arith.constant 0 : index
    %1 = memref.load %arg1[%c0_1, %c0_2] : memref<1x2xf32, #tpu.memory_space<smem>>
    %2 = arith.mulf %0, %1 : f32
    %c0_3 = arith.constant 0 : index
    %c1 = arith.constant 1 : index
    %3 = memref.load %arg0[%c0_3, %c1] : memref<1x2xf32, #tpu.memory_space<smem>>
    %c0_4 = arith.constant 0 : index
    %c1_5 = arith.constant 1 : index
    %4 = memref.load %arg1[%c0_4, %c1_5] : memref<1x2xf32, #tpu.memory_space<smem>>
    %5 = arith.mulf %3, %4 : f32
    %6 = arith.addf %2, %5 : f32
    %c0_6 = arith.constant 0 : index
    %7 = memref.load %arg2[%c0_6] : memref<1xf32, #tpu.memory_space<smem>>
    %8 = arith.addf %6, %7 : f32
    %c0_7 = arith.constant 0 : index
    %c0_8 = arith.constant 0 : index
    %9 = memref.load %arg3[%c0_7, %c0_8] : memref<1x1xf32, #tpu.memory_space<smem>>
    memref.store %8, %arg3[%c0_7, %c0_8] : memref<1x1xf32, #tpu.memory_space<smem>>
    return
  }
}

</mosaic_0001>

<llo_original>
// kernel: tpu_custom_call.1
$region0: #{tpu_custom_call.1}
  #allocation0 [shape = 'u32[]', space=smem, size = 0x4, offset = 0x4, fixed_abs, tag = 'smem constant byte address 0x4 - core index']
  #allocation1 [shape = 'u32[144,128]{1,0:T(1,128)}', space=vmem, size = 0x12000, scoped, tag = 'internal scratch']
  #allocation2 [shape = 'f32[1]{0:T(128)S(6)}', space=smem, size = 0x200, scoped, tag = 'scoped memory for tpu_custom_call.1']
  %s0 = inlined_call_operand.vmem [shape: f32[1,2], index: 0, kind: input, shape index: {}]
  %s1 = inlined_call_operand.vmem [shape: f32[1,2], index: 1, kind: input, shape index: {}]
  %s2 = inlined_call_operand.<no memory space> [shape: f32[1], index: 2, kind: input, shape index: {}]
  %s3 = inlined_call_operand.hbm [shape: f32[1,1], index: 3, kind: output, shape index: {}]
  %s4 = sld [smem:[#allocation0]]
  $region30: #{tpu_custom_call.1} parent=0
    _
  %s6 = ssub.s32 1, %s4
  %s7 = scalar_select 0, %s6, %s4
  %8 = sst [smem:[#allocation2]] %s2
  $region1: #{tpu_custom_call.1} parent=0
    #allocation3 [shape = 'u8[512]{0}', space=smem, size = 0x200, scoped, tag = 'input window, operand 0, single buffered']
    #allocation4 [shape = 's32[1]{0}', space=sflag, size = 0x4, scoped, tag = 'scoped memory for tpu_custom_call.1']
    #allocation5 [shape = 's32[1]{0}', space=sflag, size = 0x4, scoped, tag = 'scoped memory for tpu_custom_call.1']
    #allocation6 [shape = 'u8[512]{0}', space=smem, size = 0x200, scoped, tag = 'input window, operand 1, single buffered']
    #allocation7 [shape = 's32[1]{0}', space=sflag, size = 0x4, scoped, tag = 'scoped memory for tpu_custom_call.1']
    #allocation8 [shape = 'u8[512]{0}', space=smem, size = 0x200, scoped, tag = 'output window, operand 0, single buffered']
    %9 = vsyncpa [#allocation5], 0
    %10 = vsyncpa [#allocation7], 0
    %11 = vsyncpa [#allocation4], 0
    // Predicated region
    $region2: #{tpu_custom_call.1} parent=1 // pred_check
      _
    $region3: #{tpu_custom_call.1} parent=1 // pred_check_branch
      %13 = sbr.rel (0) target = $region5
    $region4: #{tpu_custom_call.1} parent=1 // pred_region
      %s15 = ssub.s32 16, 16
      %16 = vsyncadd [#allocation5], %s15
      %s18 = sshll.u32 %s0, 4
      %s19 = int_to_ptr.vmem [resolvable:$true] %s18
      %21 = dma.vmem_to_smem %s19, 16, [#allocation3], [#allocation5]
    $region5: #{tpu_custom_call.1} parent=1 // pred_fallthru
      _
    // Predicated region
    $region6: #{tpu_custom_call.1} parent=1 // pred_check
      _
    $region7: #{tpu_custom_call.1} parent=1 // pred_check_branch
      %23 = sbr.rel (0) target = $region9
    $region8: #{tpu_custom_call.1} parent=1 // pred_region
      %s25 = ssub.s32 16, 16
      %26 = vsyncadd [#allocation7], %s25
      %s28 = sshll.u32 %s1, 4
      %s29 = int_to_ptr.vmem [resolvable:$true] %s28
      %31 = dma.vmem_to_smem %s29, 16, [#allocation6], [#allocation7]
    $region9: #{tpu_custom_call.1} parent=1 // pred_fallthru
      _
    // Predicated region
    $region10: #{tpu_custom_call.1} parent=1 // pred_check
      _
    $region11: #{tpu_custom_call.1} parent=1 // pred_check_branch
      %33 = sbr.rel (0) target = $region13
    $region12: #{tpu_custom_call.1} parent=1 // pred_region
      _
    $region13: #{tpu_custom_call.1} parent=1 // pred_fallthru
      _
    // Predicated region
    $region14: #{tpu_custom_call.1} parent=1 // pred_check
      _
    $region15: #{tpu_custom_call.1} parent=1 // pred_check_branch
      %35 = sbr.rel (0) target = $region17
    $region16: #{tpu_custom_call.1} parent=1 // pred_region
      %36 = dma.done [#allocation5], 16
    $region17: #{tpu_custom_call.1} parent=1 // pred_fallthru
      _
    // Predicated region
    $region18: #{tpu_custom_call.1} parent=1 // pred_check
      _
    $region19: #{tpu_custom_call.1} parent=1 // pred_check_branch
      %38 = sbr.rel (0) target = $region21
    $region20: #{tpu_custom_call.1} parent=1 // pred_region
      %39 = dma.done [#allocation7], 16
    $region21: #{tpu_custom_call.1} parent=1 // pred_fallthru
      _
    %40 = sfence
    %s41 = sld [smem:[#allocation3]]
    %s42 = sld [smem:[#allocation6]]
    %s43 = smul.f32 %s41, %s42
    %s44 = sld [smem:[#allocation3 + $0x1]]
    %s45 = sld [smem:[#allocation6 + $0x1]]
    %s46 = smul.f32 %s44, %s45
    %s47 = sadd.f32 %s43, %s46
    %s48 = sld [smem:[#allocation2]]
    %s49 = sadd.f32 %s47, %s48
    %s50 = scalar_lea.smem [#allocation8], 0
    %51 = sst [smem:[%s50]] %s49
    // Predicated region
    $region22: #{tpu_custom_call.1} parent=1 // pred_check
      _
    $region23: #{tpu_custom_call.1} parent=1 // pred_check_branch
      %53 = sbr.rel (0) target = $region25
    $region24: #{tpu_custom_call.1} parent=1 // pred_region
      %s55 = ssub.s32 16, 16
      %56 = vsyncadd [#allocation4], %s55
      %59 = dma.smem_to_hbm [#allocation8], 16, %s3, [#allocation4]
    $region25: #{tpu_custom_call.1} parent=1 // pred_fallthru
      _
    // Predicated region
    $region26: #{tpu_custom_call.1} parent=1 // pred_check
      _
    $region27: #{tpu_custom_call.1} parent=1 // pred_check_branch
      %61 = sbr.rel (0) target = $region29
    $region28: #{tpu_custom_call.1} parent=1 // pred_region
      %62 = dma.done [#allocation4], 16
    $region29: #{tpu_custom_call.1} parent=1 // pred_fallthru
      _
    %63 = sfence
    %64 = vsyncpa [#allocation4], 1
    %65 = vsyncpa [#allocation5], 1
    %66 = vsyncpa [#allocation7], 1

</llo_original>
